<compile_context>
chip_gen: v5e
topology: v5e:2x2
jax: 0.10.0
libtpu: 0.0.40
codegen_flags: <defaults>
</compile_context>

<pallas_src>
import jax
import jax.numpy as jnp
from jax.experimental import pallas as pl
from jax.experimental.pallas import tpu as pltpu

LN_EPS = 1e-5  # PyTorch nn.LayerNorm default


def _round_up(a, b):
    return (a + b - 1) // b * b


def _traj_embed_kernel(x_ref, w_ref, b_ref, g_ref, beta_ref, o_ref):
    """Fused Linear + LayerNorm + (batch, seq) -> (seq, batch) permute.

    x_ref:    [batch, TILE_S, input_dim]   one seq-tile, all batches
    w_ref:    [input_dim, d_model]         resident in VMEM
    b_ref, g_ref, beta_ref: [1, d_model]   resident in VMEM
    o_ref:    [TILE_S, batch * d_model]    flattened transposed output layout
    """
    batch, tile_s, k_dim = x_ref.shape
    d_model = w_ref.shape[1]

    bias = b_ref[...].astype(jnp.float32)
    gamma = g_ref[...].astype(jnp.float32)
    beta = beta_ref[...].astype(jnp.float32)

    # Fuse batch into rows (layout-preserving: tile_s is a multiple of 8 sublanes).
    xb = x_ref[...].reshape(batch * tile_s, k_dim)

    if k_dim < 8:
        # Tiny-K path: K broadcast FMAs on the VPU; the MXU would be wasted at K=2.
        w = w_ref[...].astype(jnp.float32)
        y = xb[:, 0:1].astype(jnp.float32) * w[0:1, :] + bias  # bias folded into init
        for k in range(1, k_dim):
            y = y + xb[:, k:k + 1].astype(jnp.float32) * w[k:k + 1, :]
    else:
        # MXU path with f32 accumulation for larger contraction dims.
        y = jnp.dot(xb, w_ref[...], preferred_element_type=jnp.float32) + bias

    # LayerNorm over d_model with two independent reductions (less exposed XLU latency).
    inv_d = 1.0 / d_model
    mean = jnp.sum(y, axis=-1, keepdims=True) * inv_d
    mean_sq = jnp.sum(y * y, axis=-1, keepdims=True) * inv_d
    var = jnp.maximum(mean_sq - mean * mean, 0.0)
    out = ((y - mean) * jax.lax.rsqrt(var + LN_EPS) * gamma + beta).astype(o_ref.dtype)

    # Dense unmasked stores: static sublane slice of `out` -> static lane slice of o_ref.
    for b in range(batch):
        o_ref[:, b * d_model:(b + 1) * d_model] = out[b * tile_s:(b + 1) * tile_s, :]


def trajectory_embedding(x, weight, bias, gamma, beta, *, tile_s=1024):
    """x: [batch, seq, input_dim] -> [seq, batch, d_model].

    Equivalent to LayerNorm(Linear(x)).transpose(0, 1) of the PyTorch module.
    Contracts: `weight` is [input_dim, d_model] (transpose of nn.Linear.weight);
    `bias`, `gamma`, `beta` are passed as 2-D [1, d_model].
    """
    batch, seq, input_dim = x.shape
    d_model = weight.shape[1]
    itemsize = jnp.dtype(x.dtype).itemsize

    # --- tile selection -----------------------------------------------------
    # Keep >= 2 grid steps when the sequence allows it (both v7x TCs get work),
    # sublane-align, and keep the double-buffered in+out blocks under ~24 MiB
    # (the x block lane-pads input_dim -> 128, so it is counted at 128 lanes).
    half_seq = _round_up(pl.cdiv(seq, 2), 8) if seq > 8 else 8
    tile_s = max(8, min(_round_up(tile_s, 8), half_seq))

    def _block_bytes(ts):
        return 2 * (batch * ts * 128 + ts * batch * d_model) * itemsize

    while tile_s > 8 and _block_bytes(tile_s) > 24 * 1024 * 1024:
        tile_s = max(8, _round_up(tile_s // 2, 8))

    seq_p = _round_up(seq, tile_s)
    if seq_p != seq:
        # Zero padded rows: LN of the bias row is well-defined; rows sliced off below.
        x = jnp.pad(x, ((0, 0), (0, seq_p - seq), (0, 0)))

    grid = (seq_p // tile_s,)
    out_dtype = x.dtype

    out = pl.pallas_call(
        _traj_embed_kernel,
        out_shape=jax.ShapeDtypeStruct((seq_p, batch * d_model), out_dtype),
        grid_spec=pltpu.PrefetchScalarGridSpec(
            num_scalar_prefetch=0,
            grid=grid,
            in_specs=[
                # One seq-tile of every batch element.
                pl.BlockSpec((batch, tile_s, input_dim), lambda s: (0, s, 0)),
                # Parameters stay resident in VMEM across the whole grid.
                pl.BlockSpec((input_dim, d_model), lambda s: (0, 0)),
                pl.BlockSpec((1, d_model), lambda s: (0, 0)),
                pl.BlockSpec((1, d_model), lambda s: (0, 0)),
                pl.BlockSpec((1, d_model), lambda s: (0, 0)),
            ],
            # Flattened, lane-dense output block: unmasked stores + dense writeback.
            out_specs=pl.BlockSpec((tile_s, batch * d_model), lambda s: (s, 0)),
        ),
        compiler_params=pltpu.CompilerParams(
            dimension_semantics=("parallel",),      # shard seq tiles across TCs (v7x)
            vmem_limit_bytes=32 * 1024 * 1024,      # block budget capped at 24 MiB above
        ),
    )(x, weight, bias, gamma, beta)

    # Free reshape (same memory layout) recovers the [seq, batch, d_model] view.
    out = out.reshape(seq_p, batch, d_model)
    return out[:seq] if seq_p != seq else out


if __name__ == "__main__":
    # Small shapes consistent with the module defaults (input_dim=2, d_model=256).
    batch, seq, input_dim, d_model = 2, 128, 2, 256

    key = jax.random.PRNGKey(0)
    kx, kw, kb = jax.random.split(key, 3)

    x = jax.random.normal(kx, (batch, seq, input_dim), dtype=jnp.float32)

    # nn.Linear-style uniform init; LayerNorm gamma=1, beta=0.
    bound = 1.0 / (input_dim ** 0.5)
    weight = jax.random.uniform(kw, (input_dim, d_model), jnp.float32, -bound, bound)
    bias = jax.random.uniform(kb, (1, d_model), jnp.float32, -bound, bound)
    gamma = jnp.ones((1, d_model), jnp.float32)
    beta = jnp.zeros((1, d_model), jnp.float32)

    out = trajectory_embedding(x, weight, bias, gamma, beta)
    jax.block_until_ready(out)

    # Pure-JAX reference (Linear -> LayerNorm -> transpose), two-pass variance.
    y_ref = x.reshape(-1, input_dim) @ weight + bias
    m = y_ref.mean(-1, keepdims=True)
    v = ((y_ref - m) ** 2).mean(-1, keepdims=True)
    ref = (y_ref - m) * jax.lax.rsqrt(v + LN_EPS) * gamma + beta
    ref = ref.reshape(batch, seq, d_model).transpose(1, 0, 2)

    assert out.shape == (seq, batch, d_model)
    assert jnp.allclose(out, ref, atol=2e-5, rtol=2e-5)

    print("KERNEL_OK")
</pallas_src>

<mosaic_0001>
module attributes {stable_mosaic.version = 11 : i64} {
  func.func @_traj_embed_kernel(%arg0: i32, %arg1: memref<2x64x2xf32, #tpu.memory_space<vmem>>, %arg2: memref<2x256xf32, #tpu.memory_space<vmem>>, %arg3: memref<1x256xf32, #tpu.memory_space<vmem>>, %arg4: memref<1x256xf32, #tpu.memory_space<vmem>>, %arg5: memref<1x256xf32, #tpu.memory_space<vmem>>, %arg6: memref<64x512xf32, #tpu.memory_space<vmem>>) attributes {dimension_semantics = [#tpu.dimension_semantics<parallel>], iteration_bounds = array<i64: 2>, scalar_prefetch = 0 : i64, scratch_operands = 0 : i64, tpu.core_type = #tpu.core_type<tc>, window_params = [{transform_indices = @transform_0, window_bounds = array<i64: 2, 64, 2>}, {pipeline_mode = #tpu.pipeline_mode<synchronous>, transform_indices = @transform_1, window_bounds = array<i64: 2, 256>}, {pipeline_mode = #tpu.pipeline_mode<synchronous>, transform_indices = @transform_2, window_bounds = array<i64: 1, 256>}, {pipeline_mode = #tpu.pipeline_mode<synchronous>, transform_indices = @transform_3, window_bounds = array<i64: 1, 256>}, {pipeline_mode = #tpu.pipeline_mode<synchronous>, transform_indices = @transform_4, window_bounds = array<i64: 1, 256>}, {transform_indices = @transform_5, window_bounds = array<i64: 64, 512>}]} {
    %c0 = arith.constant 0 : index
    %c0_0 = arith.constant 0 : index
    %0 = vector.load %arg3[%c0, %c0_0] : memref<1x256xf32, #tpu.memory_space<vmem>>, vector<1x256xf32>
    %c0_1 = arith.constant 0 : index
    %c0_2 = arith.constant 0 : index
    %1 = vector.load %arg4[%c0_1, %c0_2] : memref<1x256xf32, #tpu.memory_space<vmem>>, vector<1x256xf32>
    %c0_3 = arith.constant 0 : index
    %c0_4 = arith.constant 0 : index
    %2 = vector.load %arg5[%c0_3, %c0_4] : memref<1x256xf32, #tpu.memory_space<vmem>>, vector<1x256xf32>
    %c0_5 = arith.constant 0 : index
    %c0_6 = arith.constant 0 : index
    %c0_7 = arith.constant 0 : index
    %3 = vector.load %arg1[%c0_5, %c0_6, %c0_7] : memref<2x64x2xf32, #tpu.memory_space<vmem>>, vector<2x64x2xf32>
    %4 = vector.shape_cast %3 : vector<2x64x2xf32> to vector<128x2xf32>
    %c0_8 = arith.constant 0 : index
    %c0_9 = arith.constant 0 : index
    %5 = vector.load %arg2[%c0_8, %c0_9] : memref<2x256xf32, #tpu.memory_space<vmem>>, vector<2x256xf32>
    %6 = vector.extract_strided_slice %4 {offsets = [0, 0], sizes = [128, 1], strides = [1, 1]} : vector<128x2xf32> to vector<128x1xf32>
    %7 = vector.extract_strided_slice %5 {offsets = [0, 0], sizes = [1, 256], strides = [1, 1]} : vector<2x256xf32> to vector<1x256xf32>
    %8 = vector.broadcast %6 : vector<128x1xf32> to vector<128x256xf32>
    %9 = vector.broadcast %7 : vector<1x256xf32> to vector<128x256xf32>
    %10 = arith.mulf %8, %9 : vector<128x256xf32>
    %11 = vector.broadcast %0 : vector<1x256xf32> to vector<128x256xf32>
    %12 = arith.addf %10, %11 : vector<128x256xf32>
    %13 = vector.extract_strided_slice %4 {offsets = [0, 1], sizes = [128, 1], strides = [1, 1]} : vector<128x2xf32> to vector<128x1xf32>
    %14 = vector.extract_strided_slice %5 {offsets = [1, 0], sizes = [1, 256], strides = [1, 1]} : vector<2x256xf32> to vector<1x256xf32>
    %15 = vector.broadcast %13 : vector<128x1xf32> to vector<128x256xf32>
    %16 = vector.broadcast %14 : vector<1x256xf32> to vector<128x256xf32>
    %17 = arith.mulf %15, %16 : vector<128x256xf32>
    %18 = arith.addf %12, %17 : vector<128x256xf32>
    %cst = arith.constant dense<0.000000e+00> : vector<128xf32>
    %19 = vector.multi_reduction <add>, %18, %cst [1] : vector<128x256xf32> to vector<128xf32>
    %20 = vector.shape_cast %19 : vector<128xf32> to vector<128x1xf32>
    %cst_10 = arith.constant 3.906250e-03 : f32
    %21 = vector.broadcast %cst_10 : f32 to vector<128x1xf32>
    %22 = arith.mulf %20, %21 : vector<128x1xf32>
    %23 = arith.mulf %18, %18 : vector<128x256xf32>
    %cst_11 = arith.constant dense<0.000000e+00> : vector<128xf32>
    %24 = vector.multi_reduction <add>, %23, %cst_11 [1] : vector<128x256xf32> to vector<128xf32>
    %25 = vector.shape_cast %24 : vector<128xf32> to vector<128x1xf32>
    %cst_12 = arith.constant 3.906250e-03 : f32
    %26 = vector.broadcast %cst_12 : f32 to vector<128x1xf32>
    %27 = arith.mulf %25, %26 : vector<128x1xf32>
    %28 = arith.mulf %22, %22 : vector<128x1xf32>
    %29 = arith.subf %27, %28 : vector<128x1xf32>
    %cst_13 = arith.constant 0.000000e+00 : f32
    %30 = vector.broadcast %cst_13 : f32 to vector<128x1xf32>
    %31 = arith.maximumf %29, %30 : vector<128x1xf32>
    %32 = vector.broadcast %22 : vector<128x1xf32> to vector<128x256xf32>
    %33 = arith.subf %18, %32 : vector<128x256xf32>
    %cst_14 = arith.constant 9.99999974E-6 : f32
    %34 = vector.broadcast %cst_14 : f32 to vector<128x1xf32>
    %35 = arith.addf %31, %34 : vector<128x1xf32>
    %36 = math.rsqrt %35 : vector<128x1xf32>
    %37 = vector.broadcast %36 : vector<128x1xf32> to vector<128x256xf32>
    %38 = arith.mulf %33, %37 : vector<128x256xf32>
    %39 = vector.broadcast %1 : vector<1x256xf32> to vector<128x256xf32>
    %40 = arith.mulf %38, %39 : vector<128x256xf32>
    %41 = vector.broadcast %2 : vector<1x256xf32> to vector<128x256xf32>
    %42 = arith.addf %40, %41 : vector<128x256xf32>
    %43 = vector.extract_strided_slice %42 {offsets = [0, 0], sizes = [64, 256], strides = [1, 1]} : vector<128x256xf32> to vector<64x256xf32>
    %c0_15 = arith.constant 0 : index
    %c0_16 = arith.constant 0 : index
    %44 = vector.load %arg6[%c0_15, %c0_16] : memref<64x512xf32, #tpu.memory_space<vmem>>, vector<64x256xf32>
    tpu.vector_store %arg6[%c0_15, %c0_16], %43 {strides = array<i32>} : memref<64x512xf32, #tpu.memory_space<vmem>>, vector<64x256xf32>,
    %45 = vector.extract_strided_slice %42 {offsets = [64, 0], sizes = [64, 256], strides = [1, 1]} : vector<128x256xf32> to vector<64x256xf32>
    %c0_17 = arith.constant 0 : index
    %c256 = arith.constant 256 : index
    %46 = vector.load %arg6[%c0_17, %c256] : memref<64x512xf32, #tpu.memory_space<vmem>>, vector<64x256xf32>
    tpu.vector_store %arg6[%c0_17, %c256], %45 {strides = array<i32>} : memref<64x512xf32, #tpu.memory_space<vmem>>, vector<64x256xf32>,
    return
  }
  func.func @transform_0(%arg0: i32) -> (i32, i32, i32) {
    %c0_i32 = arith.constant 0 : i32
    %c0_i32_0 = arith.constant 0 : i32
    %c0_i32_1 = arith.constant 0 : i32
    return %c0_i32, %arg0, %c0_i32_0 : i32, i32, i32
  }
  func.func @transform_1(%arg0: i32) -> (i32, i32) {
    %c0_i32 = arith.constant 0 : i32
    %c0_i32_0 = arith.constant 0 : i32
    %c0_i32_1 = arith.constant 0 : i32
    return %c0_i32, %c0_i32_0 : i32, i32
  }
  func.func @transform_2(%arg0: i32) -> (i32, i32) {
    %c0_i32 = arith.constant 0 : i32
    %c0_i32_0 = arith.constant 0 : i32
    %c0_i32_1 = arith.constant 0 : i32
    return %c0_i32, %c0_i32_0 : i32, i32
  }
  func.func @transform_3(%arg0: i32) -> (i32, i32) {
    %c0_i32 = arith.constant 0 : i32
    %c0_i32_0 = arith.constant 0 : i32
    %c0_i32_1 = arith.constant 0 : i32
    return %c0_i32, %c0_i32_0 : i32, i32
  }
  func.func @transform_4(%arg0: i32) -> (i32, i32) {
    %c0_i32 = arith.constant 0 : i32
    %c0_i32_0 = arith.constant 0 : i32
    %c0_i32_1 = arith.constant 0 : i32
    return %c0_i32, %c0_i32_0 : i32, i32
  }
  func.func @transform_5(%arg0: i32) -> (i32, i32) {
    %c0_i32 = arith.constant 0 : i32
    %c0_i32_0 = arith.constant 0 : i32
    return %arg0, %c0_i32 : i32, i32
  }
}

</mosaic_0001>

<llo_original>
// kernel: tpu_custom_call.1
$region0: #{tpu_custom_call.1}
  #allocation0 [shape = 'u32[]', space=smem, size = 0x4, offset = 0x4, fixed_abs, tag = 'smem constant byte address 0x4 - core index']
  #allocation1 [shape = 'u32[72,128]{1,0:T(1,128)}', space=vmem, size = 0x9000, scoped, tag = 'internal scratch']
  %s0 = inlined_call_operand.vmem [shape: f32[2,128,2], index: 0, kind: input, shape index: {}]
  %s1 = inlined_call_operand.vmem [shape: f32[2,256], index: 1, kind: input, shape index: {}]
  %s2 = inlined_call_operand.vmem [shape: f32[1,256], index: 2, kind: input, shape index: {}]
  %s3 = inlined_call_operand.vmem [shape: f32[1,256], index: 3, kind: input, shape index: {}]
  %s4 = inlined_call_operand.vmem [shape: f32[1,256], index: 4, kind: input, shape index: {}]
  %s5 = inlined_call_operand.hbm [shape: f32[128,512], index: 5, kind: output, shape index: {}]
  %s6 = sld [smem:[#allocation0]]
  $region91: #{tpu_custom_call.1} parent=0
    _
  %s8 = ssub.s32 1, %s6
  %s9 = scalar_select 0, %s8, %s6
  $region1: #{tpu_custom_call.1} parent=0
    #allocation2 [shape = 'u8[131072]{0}', space=vmem, size = 0x20000, scoped, tag = 'input window, operand 0']
    #allocation3 [shape = 'u8[262144]{0}', space=vmem, size = 0x40000, scoped, tag = 'output window, operand 0']
    #allocation4 [shape = 's32[2]{0}', space=sflag, size = 0x8, scoped, tag = 'scoped memory for tpu_custom_call.1']
    %10 = vsyncpa [#allocation4], 0
    %s11 = scalar_lea.sflag [#allocation4], 1
    %12 = vsyncpa %s11, 0
    loop: start=0, step=1, limit=4
    $region2: #{tpu_custom_call.1} parent=1 // loop_pre_header
      _
    $region3: #{tpu_custom_call.1} parent=1 // loop_header
      %s14 = sphi 0, %s18
      %p15 = scmp.ge.s32.totalorder %s14, 4
      %s24 = sphi 0, %s26
      %s27 = sphi 0, %s24
      %s28 = sphi 0, %s27
      %s44 = sphi 0, %s28
      %s48 = sphi 0, %s48
      %s50 = sphi 0, %s48
      %s51 = sphi 0, %s50
      %s65 = sphi 0, %s51
      %s69 = sphi 0, %s69
      %s71 = sphi 0, %s69
      %s72 = sphi 0, %s71
      %s86 = sphi 0, %s72
      %s90 = sphi 0, %s90
      %s92 = sphi 0, %s90
      %s93 = sphi 0, %s92
      %s107 = sphi 0, %s93
      %s111 = sphi 0, %s111
      %s113 = sphi 0, %s111
      %s114 = sphi 0, %s113
      %s128 = sphi 0, %s114
      %s134 = sphi 0, %s136
      %s137 = sphi 0, %s134
      %s138 = sphi 0, %s137
      %s154 = sphi 0, %s138
    $region4: #{tpu_custom_call.1} parent=1 // loop_header_branch
      %17 = sbr.rel (%p15) target = $region8
    $region5: #{tpu_custom_call.1} parent=1 // loop_body
      %s19 = ssub.s32 %s14, 1
      %s20 = ssub.s32 %s14, 2
      %s21 = sadd.s32 %s14, 1
      %s22 = ssub.s32 %s14, %s21
      %p23 = scmp.eq.s32.totalorder %s22, 0
      %s25 = sadd.s32 %s24, 1
      %s26 = scalar_select %p23, %s24, %s25
      %p29 = pneg %p23
      %p30 = scmp.eq.s32.totalorder %s14, 1
      %p31 = por %p29, %p30
      %p32 = scmp.ne.s32.totalorder %s24, %s27
      %p33 = scmp.eq.s32.totalorder %s14, 0
      %p34 = por %p32, %p33
      %p35 = scmp.ne.s32.totalorder %s24, %s27
      %p36 = scmp.eq.s32.totalorder %s19, 1
      %p37 = por %p35, %p36
      %p38 = scmp.ne.s32.totalorder %s27, %s28
      %p39 = scmp.eq.s32.totalorder %s19, 0
      %p40 = por %p38, %p39
      %p41 = scmp.ne.s32.totalorder %s27, %s28
      %p42 = scmp.eq.s32.totalorder %s20, 1
      %p43 = por %p41, %p42
      %p45 = scmp.ne.s32.totalorder %s28, %s44
      %p46 = scmp.eq.s32.totalorder %s20, 0
      %p47 = por %p45, %p46
      %s49 = sadd.s32 %s48, 1
      %p52 = scmp.eq.s32.totalorder %s14, 1
      %p53 = scmp.ne.s32.totalorder %s48, %s50
      %p54 = scmp.eq.s32.totalorder %s14, 0
      %p55 = por %p53, %p54
      %p56 = scmp.ne.s32.totalorder %s48, %s50
      %p57 = scmp.eq.s32.totalorder %s19, 1
      %p58 = por %p56, %p57
      %p59 = scmp.ne.s32.totalorder %s50, %s51
      %p60 = scmp.eq.s32.totalorder %s19, 0
      %p61 = por %p59, %p60
      %p62 = scmp.ne.s32.totalorder %s50, %s51
      %p63 = scmp.eq.s32.totalorder %s20, 1
      %p64 = por %p62, %p63
      %p66 = scmp.ne.s32.totalorder %s51, %s65
      %p67 = scmp.eq.s32.totalorder %s20, 0
      %p68 = por %p66, %p67
      %s70 = sadd.s32 %s69, 1
      %p73 = scmp.eq.s32.totalorder %s14, 1
      %p74 = scmp.ne.s32.totalorder %s69, %s71
      %p75 = scmp.eq.s32.totalorder %s14, 0
      %p76 = por %p74, %p75
      %p77 = scmp.ne.s32.totalorder %s69, %s71
      %p78 = scmp.eq.s32.totalorder %s19, 1
      %p79 = por %p77, %p78
      %p80 = scmp.ne.s32.totalorder %s71, %s72
      %p81 = scmp.eq.s32.totalorder %s19, 0
      %p82 = por %p80, %p81
      %p83 = scmp.ne.s32.totalorder %s71, %s72
      %p84 = scmp.eq.s32.totalorder %s20, 1
      %p85 = por %p83, %p84
      %p87 = scmp.ne.s32.totalorder %s72, %s86
      %p88 = scmp.eq.s32.totalorder %s20, 0
      %p89 = por %p87, %p88
      %s91 = sadd.s32 %s90, 1
      %p94 = scmp.eq.s32.totalorder %s14, 1
      %p95 = scmp.ne.s32.totalorder %s90, %s92
      %p96 = scmp.eq.s32.totalorder %s14, 0
      %p97 = por %p95, %p96
      %p98 = scmp.ne.s32.totalorder %s90, %s92
      %p99 = scmp.eq.s32.totalorder %s19, 1
      %p100 = por %p98, %p99
      %p101 = scmp.ne.s32.totalorder %s92, %s93
      %p102 = scmp.eq.s32.totalorder %s19, 0
      %p103 = por %p101, %p102
      %p104 = scmp.ne.s32.totalorder %s92, %s93
      %p105 = scmp.eq.s32.totalorder %s20, 1
      %p106 = por %p104, %p105
      %p108 = scmp.ne.s32.totalorder %s93, %s107
      %p109 = scmp.eq.s32.totalorder %s20, 0
      %p110 = por %p108, %p109
      %s112 = sadd.s32 %s111, 1
      %p115 = scmp.eq.s32.totalorder %s14, 1
      %p116 = scmp.ne.s32.totalorder %s111, %s113
      %p117 = scmp.eq.s32.totalorder %s14, 0
      %p118 = por %p116, %p117
      %p119 = scmp.ne.s32.totalorder %s111, %s113
      %p120 = scmp.eq.s32.totalorder %s19, 1
      %p121 = por %p119, %p120
      %p122 = scmp.ne.s32.totalorder %s113, %s114
      %p123 = scmp.eq.s32.totalorder %s19, 0
      %p124 = por %p122, %p123
      %p125 = scmp.ne.s32.totalorder %s113, %s114
      %p126 = scmp.eq.s32.totalorder %s20, 1
      %p127 = por %p125, %p126
      %p129 = scmp.ne.s32.totalorder %s114, %s128
      %p130 = scmp.eq.s32.totalorder %s20, 0
      %p131 = por %p129, %p130
      %s132 = ssub.s32 %s14, %s21
      %p133 = scmp.eq.s32.totalorder %s132, 0
      %s135 = sadd.s32 %s134, 1
      %s136 = scalar_select %p133, %s134, %s135
      %p139 = pneg %p133
      %p140 = scmp.eq.s32.totalorder %s14, 1
      %p141 = por %p139, %p140
      %p142 = scmp.ne.s32.totalorder %s134, %s137
      %p143 = scmp.eq.s32.totalorder %s14, 0
      %p144 = por %p142, %p143
      %p145 = scmp.ne.s32.totalorder %s134, %s137
      %p146 = scmp.eq.s32.totalorder %s19, 1
      %p147 = por %p145, %p146
      %p148 = scmp.ne.s32.totalorder %s137, %s138
      %p149 = scmp.eq.s32.totalorder %s19, 0
      %p150 = por %p148, %p149
      %p151 = scmp.ne.s32.totalorder %s137, %s138
      %p152 = scmp.eq.s32.totalorder %s20, 1
      %p153 = por %p151, %p152
      %p155 = scmp.ne.s32.totalorder %s138, %s154
      %p156 = scmp.eq.s32.totalorder %s20, 0
      %p157 = por %p155, %p156
      %p158 = scmp.le.s32.totalorder 1, %s14
      %p159 = scmp.lt.s32.totalorder %s14, 3
      %p160 = pnand %p158, %p159
      %p161 = pneg %p160
      // Predicated region
      $region9: #{tpu_custom_call.1} parent=5 // pred_check
        _
      $region10: #{tpu_custom_call.1} parent=5 // pred_check_branch
        %163 = sbr.rel (%p160) target = $region12
      $region11: #{tpu_custom_call.1} parent=5 // pred_region
        %s164 = ssub.s32 %s14, 1
        // Predicated region
        $region13: #{tpu_custom_call.1} parent=11 // pred_check
          %p165 = pneg %p61
        $region14: #{tpu_custom_call.1} parent=11 // pred_check_branch
          %167 = sbr.rel (%p165) target = $region16
        $region15: #{tpu_custom_call.1} parent=11 // pred_region
          _
        $region16: #{tpu_custom_call.1} parent=11 // pred_fallthru
          _
        // Predicated region
        $region17: #{tpu_custom_call.1} parent=11 // pred_check
          %p168 = pneg %p82
        $region18: #{tpu_custom_call.1} parent=11 // pred_check_branch
          %170 = sbr.rel (%p168) target = $region20
        $region19: #{tpu_custom_call.1} parent=11 // pred_region
          _
        $region20: #{tpu_custom_call.1} parent=11 // pred_fallthru
          _
        // Predicated region
        $region21: #{tpu_custom_call.1} parent=11 // pred_check
          %p171 = pneg %p103
        $region22: #{tpu_custom_call.1} parent=11 // pred_check_branch
          %173 = sbr.rel (%p171) target = $region24
        $region23: #{tpu_custom_call.1} parent=11 // pred_region
          _
        $region24: #{tpu_custom_call.1} parent=11 // pred_fallthru
          _
        // Predicated region
        $region25: #{tpu_custom_call.1} parent=11 // pred_check
          %p174 = pneg %p124
        $region26: #{tpu_custom_call.1} parent=11 // pred_check_branch
          %176 = sbr.rel (%p174) target = $region28
        $region27: #{tpu_custom_call.1} parent=11 // pred_region
          _
        $region28: #{tpu_custom_call.1} parent=11 // pred_fallthru
          _
      $region12: #{tpu_custom_call.1} parent=5 // pred_fallthru
        _
      %p177 = scmp.lt.s32.totalorder %s14, 2
      // Predicated region
      $region29: #{tpu_custom_call.1} parent=5 // pred_check
        %p178 = pneg %p177
      $region30: #{tpu_custom_call.1} parent=5 // pred_check_branch
        %180 = sbr.rel (%p178) target = $region32
      $region31: #{tpu_custom_call.1} parent=5 // pred_region
        // Predicated region
        $region33: #{tpu_custom_call.1} parent=31 // pred_check
          %p181 = pneg %p34
        $region34: #{tpu_custom_call.1} parent=31 // pred_check_branch
          %183 = sbr.rel (%p181) target = $region36
        $region35: #{tpu_custom_call.1} parent=31 // pred_region
          %s184 = sand.u32 %s24, 1
          %s185 = sand.u32 %s24, 1
          %s186 = smul.addr %s185, 128
          %s187 = scalar_lea.vmem [#allocation2], %s186
          %s188 = smul.u32 8, %s14
          %s189 = smul.addr %s188, 8
          %s190 = scalar_lea.vmem %s0, %s189
          // Predicated region
          $region37: #{tpu_custom_call.1} parent=35 // pred_check
            _
          $region38: #{tpu_custom_call.1} parent=35 // pred_check_branch
            %192 = sbr.rel (0) target = $region40
          $region39: #{tpu_custom_call.1} parent=35 // pred_region
            // Predicated region
            $region41: #{tpu_custom_call.1} parent=39 // pred_check
              _
            $region42: #{tpu_custom_call.1} parent=39 // pred_check_branch
              %194 = sbr.rel (0) target = $region44
            $region43: #{tpu_custom_call.1} parent=39 // pred_region
              // Predicated region
              $region56: #{tpu_custom_call.1} parent=43 // pred_check
                _
              $region57: #{tpu_custom_call.1} parent=43 // pred_check_branch
                %240 = sbr.rel (0) target = $region59
              $region58: #{tpu_custom_call.1} parent=43 // pred_region
                loop: start=0, step=1, limit=1
                $region60: #{tpu_custom_call.1} parent=58 // loop_pre_header
                  _
                $region61: #{tpu_custom_call.1} parent=58 // loop_header
                  %s242 = sphi 0, %s246
                  %p243 = scmp.ge.s32.totalorder %s242, 1
                  %s247 = sphi %s190, %s190
                  %s248 = sphi %s187, %s187
                $region62: #{tpu_custom_call.1} parent=58 // loop_header_branch
                  %245 = sbr.rel (%p243) target = $region66
                $region63: #{tpu_custom_call.1} parent=58 // loop_body
                  %v249 = vld [vmem:[%s247] sm:$0xff]
                  %250 = vst [vmem:[%s248] sm:$0xff] %v249
                  %v251 = vld [vmem:[%s247 + $0x8] sm:$0xff]
                  %252 = vst [vmem:[%s248 + $0x8] sm:$0xff] %v251
                  %v253 = vld [vmem:[%s247 + $0x10] sm:$0xff]
                  %254 = vst [vmem:[%s248 + $0x10] sm:$0xff] %v253
                  %v255 = vld [vmem:[%s247 + $0x18] sm:$0xff]
                  %256 = vst [vmem:[%s248 + $0x18] sm:$0xff] %v255
                  %v257 = vld [vmem:[%s247 + $0x20] sm:$0xff]
                  %258 = vst [vmem:[%s248 + $0x20] sm:$0xff] %v257
                  %v259 = vld [vmem:[%s247 + $0x28] sm:$0xff]
                  %260 = vst [vmem:[%s248 + $0x28] sm:$0xff] %v259
                  %v261 = vld [vmem:[%s247 + $0x30] sm:$0xff]
                  %262 = vst [vmem:[%s248 + $0x30] sm:$0xff] %v261
                  %v263 = vld [vmem:[%s247 + $0x38] sm:$0xff]
                  %264 = vst [vmem:[%s248 + $0x38] sm:$0xff] %v263
                  %v265 = vld [vmem:[%s247 + $0x80] sm:$0xff]
                  %266 = vst [vmem:[%s248 + $0x40] sm:$0xff] %v265
                  %v267 = vld [vmem:[%s247 + $0x88] sm:$0xff]
                  %268 = vst [vmem:[%s248 + $0x48] sm:$0xff] %v267
                  %v269 = vld [vmem:[%s247 + $0x90] sm:$0xff]
                  %270 = vst [vmem:[%s248 + $0x50] sm:$0xff] %v269
                  %v271 = vld [vmem:[%s247 + $0x98] sm:$0xff]
                  %272 = vst [vmem:[%s248 + $0x58] sm:$0xff] %v271
                  %v273 = vld [vmem:[%s247 + $0xa0] sm:$0xff]
                  %274 = vst [vmem:[%s248 + $0x60] sm:$0xff] %v273
                  %v275 = vld [vmem:[%s247 + $0xa8] sm:$0xff]
                  %276 = vst [vmem:[%s248 + $0x68] sm:$0xff] %v275
                  %v277 = vld [vmem:[%s247 + $0xb0] sm:$0xff]
                  %278 = vst [vmem:[%s248 + $0x70] sm:$0xff] %v277
                  %v279 = vld [vmem:[%s247 + $0xb8] sm:$0xff]
                  %280 = vst [vmem:[%s248 + $0x78] sm:$0xff] %v279
                $region64: #{tpu_custom_call.1} parent=58 // loop_footer
                  %s246 = sadd.s32 1, %s242
                $region65: #{tpu_custom_call.1} parent=58 // loop_footer_branch
                  %241 = sbr.rel target = $region61
                $region66: #{tpu_custom_call.1} parent=58 // loop_exit
                  _
              $region59: #{tpu_custom_call.1} parent=43 // pred_fallthru
                _
              // Predicated region
              $region67: #{tpu_custom_call.1} parent=43 // pred_check
                _
              $region68: #{tpu_custom_call.1} parent=43 // pred_check_branch
                %282 = sbr.rel target = $region70
              $region69: #{tpu_custom_call.1} parent=43 // pred_region
                _
              $region70: #{tpu_custom_call.1} parent=43 // pred_fallthru
                _
            $region44: #{tpu_custom_call.1} parent=39 // pred_fallthru
              _
            // Predicated region
            $region45: #{tpu_custom_call.1} parent=39 // pred_check
              _
            $region46: #{tpu_custom_call.1} parent=39 // pred_check_branch
              %196 = sbr.rel target = $region48
            $region47: #{tpu_custom_call.1} parent=39 // pred_region
              %s198 = ssub.s32 256, 1
              loop: start=0, step=1, limit=1
              $region49: #{tpu_custom_call.1} parent=47 // loop_pre_header
                _
              $region50: #{tpu_custom_call.1} parent=47 // loop_header
                %s200 = sphi 0, %s204
                %p201 = scmp.ge.s32.totalorder %s200, 1
                %s205 = sphi %s190, %s190
                %s206 = sphi %s187, %s187
              $region51: #{tpu_custom_call.1} parent=47 // loop_header_branch
                %203 = sbr.rel (%p201) target = $region55
              $region52: #{tpu_custom_call.1} parent=47 // loop_body
                %v207 = vld [vmem:[%s205] sm:%s198]
                %208 = vst [vmem:[%s206] sm:%s198] %v207
                %v209 = vld [vmem:[%s205 + $0x8] sm:%s198]
                %210 = vst [vmem:[%s206 + $0x8] sm:%s198] %v209
                %v211 = vld [vmem:[%s205 + $0x10] sm:%s198]
                %212 = vst [vmem:[%s206 + $0x10] sm:%s198] %v211
                %v213 = vld [vmem:[%s205 + $0x18] sm:%s198]
                %214 = vst [vmem:[%s206 + $0x18] sm:%s198] %v213
                %v215 = vld [vmem:[%s205 + $0x20] sm:%s198]
                %216 = vst [vmem:[%s206 + $0x20] sm:%s198] %v215
                %v217 = vld [vmem:[%s205 + $0x28] sm:%s198]
                %218 = vst [vmem:[%s206 + $0x28] sm:%s198] %v217
                %v219 = vld [vmem:[%s205 + $0x30] sm:%s198]
                %220 = vst [vmem:[%s206 + $0x30] sm:%s198] %v219
                %v221 = vld [vmem:[%s205 + $0x38] sm:%s198]
                %222 = vst [vmem:[%s206 + $0x38] sm:%s198] %v221
                %v223 = vld [vmem:[%s205 + $0x80] sm:%s198]
                %224 = vst [vmem:[%s206 + $0x40] sm:%s198] %v223
                %v225 = vld [vmem:[%s205 + $0x88] sm:%s198]
                %226 = vst [vmem:[%s206 + $0x48] sm:%s198] %v225
                %v227 = vld [vmem:[%s205 + $0x90] sm:%s198]
                %228 = vst [vmem:[%s206 + $0x50] sm:%s198] %v227
                %v229 = vld [vmem:[%s205 + $0x98] sm:%s198]
                %230 = vst [vmem:[%s206 + $0x58] sm:%s198] %v229
                %v231 = vld [vmem:[%s205 + $0xa0] sm:%s198]
                %232 = vst [vmem:[%s206 + $0x60] sm:%s198] %v231
                %v233 = vld [vmem:[%s205 + $0xa8] sm:%s198]
                %234 = vst [vmem:[%s206 + $0x68] sm:%s198] %v233
                %v235 = vld [vmem:[%s205 + $0xb0] sm:%s198]
                %236 = vst [vmem:[%s206 + $0x70] sm:%s198] %v235
                %v237 = vld [vmem:[%s205 + $0xb8] sm:%s198]
                %238 = vst [vmem:[%s206 + $0x78] sm:%s198] %v237
              $region53: #{tpu_custom_call.1} parent=47 // loop_footer
                %s204 = sadd.s32 1, %s200
              $region54: #{tpu_custom_call.1} parent=47 // loop_footer_branch
                %199 = sbr.rel target = $region50
              $region55: #{tpu_custom_call.1} parent=47 // loop_exit
                _
            $region48: #{tpu_custom_call.1} parent=39 // pred_fallthru
              _
          $region40: #{tpu_custom_call.1} parent=35 // pred_fallthru
            _
          %283 = vnop
        $region36: #{tpu_custom_call.1} parent=31 // pred_fallthru
          _
      $region32: #{tpu_custom_call.1} parent=5 // pred_fallthru
        _
      %p284 = scmp.le.s32.totalorder 1, %s14
      %p285 = scmp.lt.s32.totalorder %s14, 3
      %p286 = pnand %p284, %p285
      %p287 = pneg %p286
      // Predicated region
      $region71: #{tpu_custom_call.1} parent=5 // pred_check
        _
      $region72: #{tpu_custom_call.1} parent=5 // pred_check_branch
        %289 = sbr.rel (%p286) target = $region74
      $region73: #{tpu_custom_call.1} parent=5 // pred_region
        %s290 = ssub.s32 %s14, 1
        %s291 = sand.u32 %s27, 1
        %s292 = sand.u32 %s27, 1
        %s293 = smul.addr %s292, 128
        %s294 = scalar_lea.vmem [#allocation2], %s293
        // Predicated region
        $region75: #{tpu_custom_call.1} parent=73 // pred_check
          %p295 = pneg %p40
        $region76: #{tpu_custom_call.1} parent=73 // pred_check_branch
          %297 = sbr.rel (%p295) target = $region78
        $region77: #{tpu_custom_call.1} parent=73 // pred_region
          _
        $region78: #{tpu_custom_call.1} parent=73 // pred_fallthru
          _
        %s298 = sand.u32 %s27, 1
        %s299 = sand.u32 %s27, 1
        %s300 = smul.addr %s299, 128
        %s301 = scalar_lea.vmem [#allocation2], %s300
        %p302 = pneg %p40
        %p303 = pneg %p37
        %p304 = pneg %p61
        %p305 = pneg %p58
        %p306 = pneg %p82
        %p307 = pneg %p79
        %p308 = pneg %p103
        %p309 = pneg %p100
        %p310 = pneg %p124
        %p311 = pneg %p121
        %p312 = pneg %p150
        %p313 = pneg %p147
        %s314 = sand.u32 %s137, 1
        %s315 = scalar_lea.sflag [#allocation4], %s314
        %s316 = sand.u32 %s137, 1
        %s317 = smul.addr %s316, 256
        %s318 = scalar_lea.vmem [#allocation3], %s317
        %s319 = smul.u32 8, %s19
        %s320 = smul.u32 8, %s19
        %v321 = vld [vmem:[%s2] sm:$0x3]
        %v322 = vld [vmem:[%s3] sm:$0x3]
        %v323 = vld [vmem:[%s4] sm:$0x3]
        %v324 = vld [vmem:[%s294] sm:$0xff]
        %v325 = vld [vmem:[%s294 + $0x8] sm:$0xff]
        %v326 = vld [vmem:[%s294 + $0x10] sm:$0xff]
        %v327 = vld [vmem:[%s294 + $0x18] sm:$0xff]
        %v328 = vld [vmem:[%s294 + $0x20] sm:$0xff]
        %v329 = vld [vmem:[%s294 + $0x28] sm:$0xff]
        %v330 = vld [vmem:[%s294 + $0x30] sm:$0xff]
        %v331 = vld [vmem:[%s294 + $0x38] sm:$0xff]
        %v332 = vld [vmem:[%s294 + $0x40] sm:$0xff]
        %v333 = vld [vmem:[%s294 + $0x48] sm:$0xff]
        %v334 = vld [vmem:[%s294 + $0x50] sm:$0xff]
        %v335 = vld [vmem:[%s294 + $0x58] sm:$0xff]
        %v336 = vld [vmem:[%s294 + $0x60] sm:$0xff]
        %v337 = vld [vmem:[%s294 + $0x68] sm:$0xff]
        %v338 = vld [vmem:[%s294 + $0x70] sm:$0xff]
        %v339 = vld [vmem:[%s294 + $0x78] sm:$0xff]
        %v340 = vld [vmem:[%s1] sm:$0xf]
        %342 = vset.pattern.permute.xlu0 0
        %343 = vperm.xlu0 %342, %v324
        %v344 = vpop.permute.xlu0 %343
        %347 = vset.pattern.permute.xlu0 0
        %348 = vperm.xlu0 %347, %v325
        %v349 = vpop.permute.xlu0 %348
        %352 = vset.pattern.permute.xlu0 0
        %353 = vperm.xlu0 %352, %v326
        %v354 = vpop.permute.xlu0 %353
        %357 = vset.pattern.permute.xlu0 0
        %358 = vperm.xlu0 %357, %v327
        %v359 = vpop.permute.xlu0 %358
        %362 = vset.pattern.permute.xlu0 0
        %363 = vperm.xlu0 %362, %v328
        %v364 = vpop.permute.xlu0 %363
        %367 = vset.pattern.permute.xlu0 0
        %368 = vperm.xlu0 %367, %v329
        %v369 = vpop.permute.xlu0 %368
        %372 = vset.pattern.permute.xlu0 0
        %373 = vperm.xlu0 %372, %v330
        %v374 = vpop.permute.xlu0 %373
        %377 = vset.pattern.permute.xlu0 0
        %378 = vperm.xlu0 %377, %v331
        %v379 = vpop.permute.xlu0 %378
        %382 = vset.pattern.permute.xlu0 0
        %383 = vperm.xlu0 %382, %v332
        %v384 = vpop.permute.xlu0 %383
        %387 = vset.pattern.permute.xlu0 0
        %388 = vperm.xlu0 %387, %v333
        %v389 = vpop.permute.xlu0 %388
        %392 = vset.pattern.permute.xlu0 0
        %393 = vperm.xlu0 %392, %v334
        %v394 = vpop.permute.xlu0 %393
        %397 = vset.pattern.permute.xlu0 0
        %398 = vperm.xlu0 %397, %v335
        %v399 = vpop.permute.xlu0 %398
        %402 = vset.pattern.permute.xlu0 0
        %403 = vperm.xlu0 %402, %v336
        %v404 = vpop.permute.xlu0 %403
        %407 = vset.pattern.permute.xlu0 0
        %408 = vperm.xlu0 %407, %v337
        %v409 = vpop.permute.xlu0 %408
        %412 = vset.pattern.permute.xlu0 0
        %413 = vperm.xlu0 %412, %v338
        %v414 = vpop.permute.xlu0 %413
        %417 = vset.pattern.permute.xlu0 0
        %418 = vperm.xlu0 %417, %v339
        %v419 = vpop.permute.xlu0 %418
        %v422 = vperm.slane %v340, 0
        %v423 = vperm.slane %v340, 2
        %v426 = vperm.slane %v422, 0
        %v427 = vperm.slane %v423, 0
        %v428 = vmul.f32 %v344, %v426
        %v429 = vmul.f32 %v344, %v427
        %v430 = vmul.f32 %v349, %v426
        %v431 = vmul.f32 %v349, %v427
        %v432 = vmul.f32 %v354, %v426
        %v433 = vmul.f32 %v354, %v427
        %v434 = vmul.f32 %v359, %v426
        %v435 = vmul.f32 %v359, %v427
        %v436 = vmul.f32 %v364, %v426
        %v437 = vmul.f32 %v364, %v427
        %v438 = vmul.f32 %v369, %v426
        %v439 = vmul.f32 %v369, %v427
        %v440 = vmul.f32 %v374, %v426
        %v441 = vmul.f32 %v374, %v427
        %v442 = vmul.f32 %v379, %v426
        %v443 = vmul.f32 %v379, %v427
        %v444 = vmul.f32 %v384, %v426
        %v445 = vmul.f32 %v384, %v427
        %v446 = vmul.f32 %v389, %v426
        %v447 = vmul.f32 %v389, %v427
        %v448 = vmul.f32 %v394, %v426
        %v449 = vmul.f32 %v394, %v427
        %v450 = vmul.f32 %v399, %v426
        %v451 = vmul.f32 %v399, %v427
        %v452 = vmul.f32 %v404, %v426
        %v453 = vmul.f32 %v404, %v427
        %v454 = vmul.f32 %v409, %v426
        %v455 = vmul.f32 %v409, %v427
        %v456 = vmul.f32 %v414, %v426
        %v457 = vmul.f32 %v414, %v427
        %v458 = vmul.f32 %v419, %v426
        %v459 = vmul.f32 %v419, %v427
        %v461 = vperm.slane %v321, 0
        %v462 = vperm.slane %v321, 1
        %v465 = vadd.f32 %v428, %v461
        %v466 = vadd.f32 %v429, %v462
        %v467 = vadd.f32 %v430, %v461
        %v468 = vadd.f32 %v431, %v462
        %v469 = vadd.f32 %v432, %v461
        %v470 = vadd.f32 %v433, %v462
        %v471 = vadd.f32 %v434, %v461
        %v472 = vadd.f32 %v435, %v462
        %v473 = vadd.f32 %v436, %v461
        %v474 = vadd.f32 %v437, %v462
        %v475 = vadd.f32 %v438, %v461
        %v476 = vadd.f32 %v439, %v462
        %v477 = vadd.f32 %v440, %v461
        %v478 = vadd.f32 %v441, %v462
        %v479 = vadd.f32 %v442, %v461
        %v480 = vadd.f32 %v443, %v462
        %v481 = vadd.f32 %v444, %v461
        %v482 = vadd.f32 %v445, %v462
        %v483 = vadd.f32 %v446, %v461
        %v484 = vadd.f32 %v447, %v462
        %v485 = vadd.f32 %v448, %v461
        %v486 = vadd.f32 %v449, %v462
        %v487 = vadd.f32 %v450, %v461
        %v488 = vadd.f32 %v451, %v462
        %v489 = vadd.f32 %v452, %v461
        %v490 = vadd.f32 %v453, %v462
        %v491 = vadd.f32 %v454, %v461
        %v492 = vadd.f32 %v455, %v462
        %v493 = vadd.f32 %v456, %v461
        %v494 = vadd.f32 %v457, %v462
        %v495 = vadd.f32 %v458, %v461
        %v496 = vadd.f32 %v459, %v462
        %497 = vset.pattern.permute.xlu0 1
        %498 = vperm.xlu0 %497, %v324
        %v499 = vpop.permute.xlu0 %498
        %501 = vset.pattern.permute.xlu0 1
        %502 = vperm.xlu0 %501, %v325
        %v503 = vpop.permute.xlu0 %502
        %505 = vset.pattern.permute.xlu0 1
        %506 = vperm.xlu0 %505, %v326
        %v507 = vpop.permute.xlu0 %506
        %509 = vset.pattern.permute.xlu0 1
        %510 = vperm.xlu0 %509, %v327
        %v511 = vpop.permute.xlu0 %510
        %513 = vset.pattern.permute.xlu0 1
        %514 = vperm.xlu0 %513, %v328
        %v515 = vpop.permute.xlu0 %514
        %517 = vset.pattern.permute.xlu0 1
        %518 = vperm.xlu0 %517, %v329
        %v519 = vpop.permute.xlu0 %518
        %521 = vset.pattern.permute.xlu0 1
        %522 = vperm.xlu0 %521, %v330
        %v523 = vpop.permute.xlu0 %522
        %525 = vset.pattern.permute.xlu0 1
        %526 = vperm.xlu0 %525, %v331
        %v527 = vpop.permute.xlu0 %526
        %529 = vset.pattern.permute.xlu0 1
        %530 = vperm.xlu0 %529, %v332
        %v531 = vpop.permute.xlu0 %530
        %533 = vset.pattern.permute.xlu0 1
        %534 = vperm.xlu0 %533, %v333
        %v535 = vpop.permute.xlu0 %534
        %537 = vset.pattern.permute.xlu0 1
        %538 = vperm.xlu0 %537, %v334
        %v539 = vpop.permute.xlu0 %538
        %541 = vset.pattern.permute.xlu0 1
        %542 = vperm.xlu0 %541, %v335
        %v543 = vpop.permute.xlu0 %542
        %545 = vset.pattern.permute.xlu0 1
        %546 = vperm.xlu0 %545, %v336
        %v547 = vpop.permute.xlu0 %546
        %549 = vset.pattern.permute.xlu0 1
        %550 = vperm.xlu0 %549, %v337
        %v551 = vpop.permute.xlu0 %550
        %553 = vset.pattern.permute.xlu0 1
        %554 = vperm.xlu0 %553, %v338
        %v555 = vpop.permute.xlu0 %554
        %557 = vset.pattern.permute.xlu0 1
        %558 = vperm.xlu0 %557, %v339
        %v559 = vpop.permute.xlu0 %558
        %v561 = vperm.slane %v340, 1
        %v562 = vperm.slane %v340, 3
        %v565 = vperm.slane %v561, 1
        %v566 = vperm.slane %v562, 1
        %v567 = vmul.f32 %v499, %v565
        %v568 = vmul.f32 %v499, %v566
        %v569 = vmul.f32 %v503, %v565
        %v570 = vmul.f32 %v503, %v566
        %v571 = vmul.f32 %v507, %v565
        %v572 = vmul.f32 %v507, %v566
        %v573 = vmul.f32 %v511, %v565
        %v574 = vmul.f32 %v511, %v566
        %v575 = vmul.f32 %v515, %v565
        %v576 = vmul.f32 %v515, %v566
        %v577 = vmul.f32 %v519, %v565
        %v578 = vmul.f32 %v519, %v566
        %v579 = vmul.f32 %v523, %v565
        %v580 = vmul.f32 %v523, %v566
        %v581 = vmul.f32 %v527, %v565
        %v582 = vmul.f32 %v527, %v566
        %v583 = vmul.f32 %v531, %v565
        %v584 = vmul.f32 %v531, %v566
        %v585 = vmul.f32 %v535, %v565
        %v586 = vmul.f32 %v535, %v566
        %v587 = vmul.f32 %v539, %v565
        %v588 = vmul.f32 %v539, %v566
        %v589 = vmul.f32 %v543, %v565
        %v590 = vmul.f32 %v543, %v566
        %v591 = vmul.f32 %v547, %v565
        %v592 = vmul.f32 %v547, %v566
        %v593 = vmul.f32 %v551, %v565
        %v594 = vmul.f32 %v551, %v566
        %v595 = vmul.f32 %v555, %v565
        %v596 = vmul.f32 %v555, %v566
        %v597 = vmul.f32 %v559, %v565
        %v598 = vmul.f32 %v559, %v566
        %v599 = vadd.f32 %v465, %v567
        %v600 = vadd.f32 %v466, %v568
        %v601 = vadd.f32 %v467, %v569
        %v602 = vadd.f32 %v468, %v570
        %v603 = vadd.f32 %v469, %v571
        %v604 = vadd.f32 %v470, %v572
        %v605 = vadd.f32 %v471, %v573
        %v606 = vadd.f32 %v472, %v574
        %v607 = vadd.f32 %v473, %v575
        %v608 = vadd.f32 %v474, %v576
        %v609 = vadd.f32 %v475, %v577
        %v610 = vadd.f32 %v476, %v578
        %v611 = vadd.f32 %v477, %v579
        %v612 = vadd.f32 %v478, %v580
        %v613 = vadd.f32 %v479, %v581
        %v614 = vadd.f32 %v480, %v582
        %v615 = vadd.f32 %v481, %v583
        %v616 = vadd.f32 %v482, %v584
        %v617 = vadd.f32 %v483, %v585
        %v618 = vadd.f32 %v484, %v586
        %v619 = vadd.f32 %v485, %v587
        %v620 = vadd.f32 %v486, %v588
        %v621 = vadd.f32 %v487, %v589
        %v622 = vadd.f32 %v488, %v590
        %v623 = vadd.f32 %v489, %v591
        %v624 = vadd.f32 %v490, %v592
        %v625 = vadd.f32 %v491, %v593
        %v626 = vadd.f32 %v492, %v594
        %v627 = vadd.f32 %v493, %v595
        %v628 = vadd.f32 %v494, %v596
        %v629 = vadd.f32 %v495, %v597
        %v630 = vadd.f32 %v496, %v598
        %v631 = vadd.f32 %v599, %v600
        %632 = vadd.xlane.f32.xlu0 %v631
        %v633 = vpop.xlane.xlu0 %632
        %v634 = vadd.f32 %v601, %v602
        %635 = vadd.xlane.f32.xlu0 %v634
        %v636 = vpop.xlane.xlu0 %635
        %v637 = vadd.f32 %v603, %v604
        %638 = vadd.xlane.f32.xlu0 %v637
        %v639 = vpop.xlane.xlu0 %638
        %v640 = vadd.f32 %v605, %v606
        %641 = vadd.xlane.f32.xlu0 %v640
        %v642 = vpop.xlane.xlu0 %641
        %v643 = vadd.f32 %v607, %v608
        %644 = vadd.xlane.f32.xlu0 %v643
        %v645 = vpop.xlane.xlu0 %644
        %v646 = vadd.f32 %v609, %v610
        %647 = vadd.xlane.f32.xlu0 %v646
        %v648 = vpop.xlane.xlu0 %647
        %v649 = vadd.f32 %v611, %v612
        %650 = vadd.xlane.f32.xlu0 %v649
        %v651 = vpop.xlane.xlu0 %650
        %v652 = vadd.f32 %v613, %v614
        %653 = vadd.xlane.f32.xlu0 %v652
        %v654 = vpop.xlane.xlu0 %653
        %v655 = vadd.f32 %v615, %v616
        %656 = vadd.xlane.f32.xlu0 %v655
        %v657 = vpop.xlane.xlu0 %656
        %v658 = vadd.f32 %v617, %v618
        %659 = vadd.xlane.f32.xlu0 %v658
        %v660 = vpop.xlane.xlu0 %659
        %v661 = vadd.f32 %v619, %v620
        %662 = vadd.xlane.f32.xlu0 %v661
        %v663 = vpop.xlane.xlu0 %662
        %v664 = vadd.f32 %v621, %v622
        %665 = vadd.xlane.f32.xlu0 %v664
        %v666 = vpop.xlane.xlu0 %665
        %v667 = vadd.f32 %v623, %v624
        %668 = vadd.xlane.f32.xlu0 %v667
        %v669 = vpop.xlane.xlu0 %668
        %v670 = vadd.f32 %v625, %v626
        %671 = vadd.xlane.f32.xlu0 %v670
        %v672 = vpop.xlane.xlu0 %671
        %v673 = vadd.f32 %v627, %v628
        %674 = vadd.xlane.f32.xlu0 %v673
        %v675 = vpop.xlane.xlu0 %674
        %v676 = vadd.f32 %v629, %v630
        %677 = vadd.xlane.f32.xlu0 %v676
        %v678 = vpop.xlane.xlu0 %677
        %v679 = vmul.f32 %v633, 0.00390625
        %v680 = vmul.f32 %v636, 0.00390625
        %v681 = vmul.f32 %v639, 0.00390625
        %v682 = vmul.f32 %v642, 0.00390625
        %v683 = vmul.f32 %v645, 0.00390625
        %v684 = vmul.f32 %v648, 0.00390625
        %v685 = vmul.f32 %v651, 0.00390625
        %v686 = vmul.f32 %v654, 0.00390625
        %v687 = vmul.f32 %v657, 0.00390625
        %v688 = vmul.f32 %v660, 0.00390625
        %v689 = vmul.f32 %v663, 0.00390625
        %v690 = vmul.f32 %v666, 0.00390625
        %v691 = vmul.f32 %v669, 0.00390625
        %v692 = vmul.f32 %v672, 0.00390625
        %v693 = vmul.f32 %v675, 0.00390625
        %v694 = vmul.f32 %v678, 0.00390625
        %v695 = vmul.f32 %v599, %v599
        %v696 = vmul.f32 %v600, %v600
        %v697 = vmul.f32 %v601, %v601
        %v698 = vmul.f32 %v602, %v602
        %v699 = vmul.f32 %v603, %v603
        %v700 = vmul.f32 %v604, %v604
        %v701 = vmul.f32 %v605, %v605
        %v702 = vmul.f32 %v606, %v606
        %v703 = vmul.f32 %v607, %v607
        %v704 = vmul.f32 %v608, %v608
        %v705 = vmul.f32 %v609, %v609
        %v706 = vmul.f32 %v610, %v610
        %v707 = vmul.f32 %v611, %v611
        %v708 = vmul.f32 %v612, %v612
        %v709 = vmul.f32 %v613, %v613
        %v710 = vmul.f32 %v614, %v614
        %v711 = vmul.f32 %v615, %v615
        %v712 = vmul.f32 %v616, %v616
        %v713 = vmul.f32 %v617, %v617
        %v714 = vmul.f32 %v618, %v618
        %v715 = vmul.f32 %v619, %v619
        %v716 = vmul.f32 %v620, %v620
        %v717 = vmul.f32 %v621, %v621
        %v718 = vmul.f32 %v622, %v622
        %v719 = vmul.f32 %v623, %v623
        %v720 = vmul.f32 %v624, %v624
        %v721 = vmul.f32 %v625, %v625
        %v722 = vmul.f32 %v626, %v626
        %v723 = vmul.f32 %v627, %v627
        %v724 = vmul.f32 %v628, %v628
        %v725 = vmul.f32 %v629, %v629
        %v726 = vmul.f32 %v630, %v630
        %v727 = vadd.f32 %v695, %v696
        %728 = vadd.xlane.f32.xlu0 %v727
        %v729 = vpop.xlane.xlu0 %728
        %v730 = vadd.f32 %v697, %v698
        %731 = vadd.xlane.f32.xlu0 %v730
        %v732 = vpop.xlane.xlu0 %731
        %v733 = vadd.f32 %v699, %v700
        %734 = vadd.xlane.f32.xlu0 %v733
        %v735 = vpop.xlane.xlu0 %734
        %v736 = vadd.f32 %v701, %v702
        %737 = vadd.xlane.f32.xlu0 %v736
        %v738 = vpop.xlane.xlu0 %737
        %v739 = vadd.f32 %v703, %v704
        %740 = vadd.xlane.f32.xlu0 %v739
        %v741 = vpop.xlane.xlu0 %740
        %v742 = vadd.f32 %v705, %v706
        %743 = vadd.xlane.f32.xlu0 %v742
        %v744 = vpop.xlane.xlu0 %743
        %v745 = vadd.f32 %v707, %v708
        %746 = vadd.xlane.f32.xlu0 %v745
        %v747 = vpop.xlane.xlu0 %746
        %v748 = vadd.f32 %v709, %v710
        %749 = vadd.xlane.f32.xlu0 %v748
        %v750 = vpop.xlane.xlu0 %749
        %v751 = vadd.f32 %v711, %v712
        %752 = vadd.xlane.f32.xlu0 %v751
        %v753 = vpop.xlane.xlu0 %752
        %v754 = vadd.f32 %v713, %v714
        %755 = vadd.xlane.f32.xlu0 %v754
        %v756 = vpop.xlane.xlu0 %755
        %v757 = vadd.f32 %v715, %v716
        %758 = vadd.xlane.f32.xlu0 %v757
        %v759 = vpop.xlane.xlu0 %758
        %v760 = vadd.f32 %v717, %v718
        %761 = vadd.xlane.f32.xlu0 %v760
        %v762 = vpop.xlane.xlu0 %761
        %v763 = vadd.f32 %v719, %v720
        %764 = vadd.xlane.f32.xlu0 %v763
        %v765 = vpop.xlane.xlu0 %764
        %v766 = vadd.f32 %v721, %v722
        %767 = vadd.xlane.f32.xlu0 %v766
        %v768 = vpop.xlane.xlu0 %767
        %v769 = vadd.f32 %v723, %v724
        %770 = vadd.xlane.f32.xlu0 %v769
        %v771 = vpop.xlane.xlu0 %770
        %v772 = vadd.f32 %v725, %v726
        %773 = vadd.xlane.f32.xlu0 %v772
        %v774 = vpop.xlane.xlu0 %773
        %v775 = vmul.f32 %v729, 0.00390625
        %v776 = vmul.f32 %v732, 0.00390625
        %v777 = vmul.f32 %v735, 0.00390625
        %v778 = vmul.f32 %v738, 0.00390625
        %v779 = vmul.f32 %v741, 0.00390625
        %v780 = vmul.f32 %v744, 0.00390625
        %v781 = vmul.f32 %v747, 0.00390625
        %v782 = vmul.f32 %v750, 0.00390625
        %v783 = vmul.f32 %v753, 0.00390625
        %v784 = vmul.f32 %v756, 0.00390625
        %v785 = vmul.f32 %v759, 0.00390625
        %v786 = vmul.f32 %v762, 0.00390625
        %v787 = vmul.f32 %v765, 0.00390625
        %v788 = vmul.f32 %v768, 0.00390625
        %v789 = vmul.f32 %v771, 0.00390625
        %v790 = vmul.f32 %v774, 0.00390625
        %v791 = vmul.f32 %v679, %v679
        %v792 = vmul.f32 %v680, %v680
        %v793 = vmul.f32 %v681, %v681
        %v794 = vmul.f32 %v682, %v682
        %v795 = vmul.f32 %v683, %v683
        %v796 = vmul.f32 %v684, %v684
        %v797 = vmul.f32 %v685, %v685
        %v798 = vmul.f32 %v686, %v686
        %v799 = vmul.f32 %v687, %v687
        %v800 = vmul.f32 %v688, %v688
        %v801 = vmul.f32 %v689, %v689
        %v802 = vmul.f32 %v690, %v690
        %v803 = vmul.f32 %v691, %v691
        %v804 = vmul.f32 %v692, %v692
        %v805 = vmul.f32 %v693, %v693
        %v806 = vmul.f32 %v694, %v694
        %v807 = vsub.f32 %v775, %v791
        %v808 = vsub.f32 %v776, %v792
        %v809 = vsub.f32 %v777, %v793
        %v810 = vsub.f32 %v778, %v794
        %v811 = vsub.f32 %v779, %v795
        %v812 = vsub.f32 %v780, %v796
        %v813 = vsub.f32 %v781, %v797
        %v814 = vsub.f32 %v782, %v798
        %v815 = vsub.f32 %v783, %v799
        %v816 = vsub.f32 %v784, %v800
        %v817 = vsub.f32 %v785, %v801
        %v818 = vsub.f32 %v786, %v802
        %v819 = vsub.f32 %v787, %v803
        %v820 = vsub.f32 %v788, %v804
        %v821 = vsub.f32 %v789, %v805
        %v822 = vsub.f32 %v790, %v806
        %v823 = vmax.f32 %v807, 0.0
        %v824 = vmax.f32 %v808, 0.0
        %v825 = vmax.f32 %v809, 0.0
        %v826 = vmax.f32 %v810, 0.0
        %v827 = vmax.f32 %v811, 0.0
        %v828 = vmax.f32 %v812, 0.0
        %v829 = vmax.f32 %v813, 0.0
        %v830 = vmax.f32 %v814, 0.0
        %v831 = vmax.f32 %v815, 0.0
        %v832 = vmax.f32 %v816, 0.0
        %v833 = vmax.f32 %v817, 0.0
        %v834 = vmax.f32 %v818, 0.0
        %v835 = vmax.f32 %v819, 0.0
        %v836 = vmax.f32 %v820, 0.0
        %v837 = vmax.f32 %v821, 0.0
        %v838 = vmax.f32 %v822, 0.0
        %v839 = vsub.f32 %v599, %v679
        %v840 = vsub.f32 %v600, %v679
        %v841 = vsub.f32 %v601, %v680
        %v842 = vsub.f32 %v602, %v680
        %v843 = vsub.f32 %v603, %v681
        %v844 = vsub.f32 %v604, %v681
        %v845 = vsub.f32 %v605, %v682
        %v846 = vsub.f32 %v606, %v682
        %v847 = vsub.f32 %v607, %v683
        %v848 = vsub.f32 %v608, %v683
        %v849 = vsub.f32 %v609, %v684
        %v850 = vsub.f32 %v610, %v684
        %v851 = vsub.f32 %v611, %v685
        %v852 = vsub.f32 %v612, %v685
        %v853 = vsub.f32 %v613, %v686
        %v854 = vsub.f32 %v614, %v686
        %v855 = vsub.f32 %v615, %v687
        %v856 = vsub.f32 %v616, %v687
        %v857 = vsub.f32 %v617, %v688
        %v858 = vsub.f32 %v618, %v688
        %v859 = vsub.f32 %v619, %v689
        %v860 = vsub.f32 %v620, %v689
        %v861 = vsub.f32 %v621, %v690
        %v862 = vsub.f32 %v622, %v690
        %v863 = vsub.f32 %v623, %v691
        %v864 = vsub.f32 %v624, %v691
        %v865 = vsub.f32 %v625, %v692
        %v866 = vsub.f32 %v626, %v692
        %v867 = vsub.f32 %v627, %v693
        %v868 = vsub.f32 %v628, %v693
        %v869 = vsub.f32 %v629, %v694
        %v870 = vsub.f32 %v630, %v694
        %v871 = vadd.f32 %v823, 1e-05
        %v872 = vadd.f32 %v824, 1e-05
        %v873 = vadd.f32 %v825, 1e-05
        %v874 = vadd.f32 %v826, 1e-05
        %v875 = vadd.f32 %v827, 1e-05
        %v876 = vadd.f32 %v828, 1e-05
        %v877 = vadd.f32 %v829, 1e-05
        %v878 = vadd.f32 %v830, 1e-05
        %v879 = vadd.f32 %v831, 1e-05
        %v880 = vadd.f32 %v832, 1e-05
        %v881 = vadd.f32 %v833, 1e-05
        %v882 = vadd.f32 %v834, 1e-05
        %v883 = vadd.f32 %v835, 1e-05
        %v884 = vadd.f32 %v836, 1e-05
        %v885 = vadd.f32 %v837, 1e-05
        %v886 = vadd.f32 %v838, 1e-05
        %v887 = vrsqrt.pop %v871
        %v888 = vmul.f32 %v887, %v871
        %v889 = vmul.f32 %v888, %v887
        %v890 = vmul.f32 0.5, %v889
        %v891 = vsub.f32 1.5, %v890
        %v892 = vmul.f32 %v887, %v891
        %vm893 = vweird.f32 %v871
        %vm894 = vweird.f32 %v887
        %vm895 = vmor %vm893, %vm894
        %v896 = vsel %vm895, %v887, %v892
        %v897 = vrsqrt.pop %v872
        %v898 = vmul.f32 %v897, %v872
        %v899 = vmul.f32 %v898, %v897
        %v900 = vmul.f32 0.5, %v899
        %v901 = vsub.f32 1.5, %v900
        %v902 = vmul.f32 %v897, %v901
        %vm903 = vweird.f32 %v872
        %vm904 = vweird.f32 %v897
        %vm905 = vmor %vm903, %vm904
        %v906 = vsel %vm905, %v897, %v902
        %v907 = vrsqrt.pop %v873
        %v908 = vmul.f32 %v907, %v873
        %v909 = vmul.f32 %v908, %v907
        %v910 = vmul.f32 0.5, %v909
        %v911 = vsub.f32 1.5, %v910
        %v912 = vmul.f32 %v907, %v911
        %vm913 = vweird.f32 %v873
        %vm914 = vweird.f32 %v907
        %vm915 = vmor %vm913, %vm914
        %v916 = vsel %vm915, %v907, %v912
        %v917 = vrsqrt.pop %v874
        %v918 = vmul.f32 %v917, %v874
        %v919 = vmul.f32 %v918, %v917
        %v920 = vmul.f32 0.5, %v919
        %v921 = vsub.f32 1.5, %v920
        %v922 = vmul.f32 %v917, %v921
        %vm923 = vweird.f32 %v874
        %vm924 = vweird.f32 %v917
        %vm925 = vmor %vm923, %vm924
        %v926 = vsel %vm925, %v917, %v922
        %v927 = vrsqrt.pop %v875
        %v928 = vmul.f32 %v927, %v875
        %v929 = vmul.f32 %v928, %v927
        %v930 = vmul.f32 0.5, %v929
        %v931 = vsub.f32 1.5, %v930
        %v932 = vmul.f32 %v927, %v931
        %vm933 = vweird.f32 %v875
        %vm934 = vweird.f32 %v927
        %vm935 = vmor %vm933, %vm934
        %v936 = vsel %vm935, %v927, %v932
        %v937 = vrsqrt.pop %v876
        %v938 = vmul.f32 %v937, %v876
        %v939 = vmul.f32 %v938, %v937
        %v940 = vmul.f32 0.5, %v939
        %v941 = vsub.f32 1.5, %v940
        %v942 = vmul.f32 %v937, %v941
        %vm943 = vweird.f32 %v876
        %vm944 = vweird.f32 %v937
        %vm945 = vmor %vm943, %vm944
        %v946 = vsel %vm945, %v937, %v942
        %v947 = vrsqrt.pop %v877
        %v948 = vmul.f32 %v947, %v877
        %v949 = vmul.f32 %v948, %v947
        %v950 = vmul.f32 0.5, %v949
        %v951 = vsub.f32 1.5, %v950
        %v952 = vmul.f32 %v947, %v951
        %vm953 = vweird.f32 %v877
        %vm954 = vweird.f32 %v947
        %vm955 = vmor %vm953, %vm954
        %v956 = vsel %vm955, %v947, %v952
        %v957 = vrsqrt.pop %v878
        %v958 = vmul.f32 %v957, %v878
        %v959 = vmul.f32 %v958, %v957
        %v960 = vmul.f32 0.5, %v959
        %v961 = vsub.f32 1.5, %v960
        %v962 = vmul.f32 %v957, %v961
        %vm963 = vweird.f32 %v878
        %vm964 = vweird.f32 %v957
        %vm965 = vmor %vm963, %vm964
        %v966 = vsel %vm965, %v957, %v962
        %v967 = vrsqrt.pop %v879
        %v968 = vmul.f32 %v967, %v879
        %v969 = vmul.f32 %v968, %v967
        %v970 = vmul.f32 0.5, %v969
        %v971 = vsub.f32 1.5, %v970
        %v972 = vmul.f32 %v967, %v971
        %vm973 = vweird.f32 %v879
        %vm974 = vweird.f32 %v967
        %vm975 = vmor %vm973, %vm974
        %v976 = vsel %vm975, %v967, %v972
        %v977 = vrsqrt.pop %v880
        %v978 = vmul.f32 %v977, %v880
        %v979 = vmul.f32 %v978, %v977
        %v980 = vmul.f32 0.5, %v979
        %v981 = vsub.f32 1.5, %v980
        %v982 = vmul.f32 %v977, %v981
        %vm983 = vweird.f32 %v880
        %vm984 = vweird.f32 %v977
        %vm985 = vmor %vm983, %vm984
        %v986 = vsel %vm985, %v977, %v982
        %v987 = vrsqrt.pop %v881
        %v988 = vmul.f32 %v987, %v881
        %v989 = vmul.f32 %v988, %v987
        %v990 = vmul.f32 0.5, %v989
        %v991 = vsub.f32 1.5, %v990
        %v992 = vmul.f32 %v987, %v991
        %vm993 = vweird.f32 %v881
        %vm994 = vweird.f32 %v987
        %vm995 = vmor %vm993, %vm994
        %v996 = vsel %vm995, %v987, %v992
        %v997 = vrsqrt.pop %v882
        %v998 = vmul.f32 %v997, %v882
        %v999 = vmul.f32 %v998, %v997
        %v1000 = vmul.f32 0.5, %v999
        %v1001 = vsub.f32 1.5, %v1000
        %v1002 = vmul.f32 %v997, %v1001
        %vm1003 = vweird.f32 %v882
        %vm1004 = vweird.f32 %v997
        %vm1005 = vmor %vm1003, %vm1004
        %v1006 = vsel %vm1005, %v997, %v1002
        %v1007 = vrsqrt.pop %v883
        %v1008 = vmul.f32 %v1007, %v883
        %v1009 = vmul.f32 %v1008, %v1007
        %v1010 = vmul.f32 0.5, %v1009
        %v1011 = vsub.f32 1.5, %v1010
        %v1012 = vmul.f32 %v1007, %v1011
        %vm1013 = vweird.f32 %v883
        %vm1014 = vweird.f32 %v1007
        %vm1015 = vmor %vm1013, %vm1014
        %v1016 = vsel %vm1015, %v1007, %v1012
        %v1017 = vrsqrt.pop %v884
        %v1018 = vmul.f32 %v1017, %v884
        %v1019 = vmul.f32 %v1018, %v1017
        %v1020 = vmul.f32 0.5, %v1019
        %v1021 = vsub.f32 1.5, %v1020
        %v1022 = vmul.f32 %v1017, %v1021
        %vm1023 = vweird.f32 %v884
        %vm1024 = vweird.f32 %v1017
        %vm1025 = vmor %vm1023, %vm1024
        %v1026 = vsel %vm1025, %v1017, %v1022
        %v1027 = vrsqrt.pop %v885
        %v1028 = vmul.f32 %v1027, %v885
        %v1029 = vmul.f32 %v1028, %v1027
        %v1030 = vmul.f32 0.5, %v1029
        %v1031 = vsub.f32 1.5, %v1030
        %v1032 = vmul.f32 %v1027, %v1031
        %vm1033 = vweird.f32 %v885
        %vm1034 = vweird.f32 %v1027
        %vm1035 = vmor %vm1033, %vm1034
        %v1036 = vsel %vm1035, %v1027, %v1032
        %v1037 = vrsqrt.pop %v886
        %v1038 = vmul.f32 %v1037, %v886
        %v1039 = vmul.f32 %v1038, %v1037
        %v1040 = vmul.f32 0.5, %v1039
        %v1041 = vsub.f32 1.5, %v1040
        %v1042 = vmul.f32 %v1037, %v1041
        %vm1043 = vweird.f32 %v886
        %vm1044 = vweird.f32 %v1037
        %vm1045 = vmor %vm1043, %vm1044
        %v1046 = vsel %vm1045, %v1037, %v1042
        %v1047 = vmul.f32 %v839, %v896
        %v1048 = vmul.f32 %v840, %v896
        %v1049 = vmul.f32 %v841, %v906
        %v1050 = vmul.f32 %v842, %v906
        %v1051 = vmul.f32 %v843, %v916
        %v1052 = vmul.f32 %v844, %v916
        %v1053 = vmul.f32 %v845, %v926
        %v1054 = vmul.f32 %v846, %v926
        %v1055 = vmul.f32 %v847, %v936
        %v1056 = vmul.f32 %v848, %v936
        %v1057 = vmul.f32 %v849, %v946
        %v1058 = vmul.f32 %v850, %v946
        %v1059 = vmul.f32 %v851, %v956
        %v1060 = vmul.f32 %v852, %v956
        %v1061 = vmul.f32 %v853, %v966
        %v1062 = vmul.f32 %v854, %v966
        %v1063 = vmul.f32 %v855, %v976
        %v1064 = vmul.f32 %v856, %v976
        %v1065 = vmul.f32 %v857, %v986
        %v1066 = vmul.f32 %v858, %v986
        %v1067 = vmul.f32 %v859, %v996
        %v1068 = vmul.f32 %v860, %v996
        %v1069 = vmul.f32 %v861, %v1006
        %v1070 = vmul.f32 %v862, %v1006
        %v1071 = vmul.f32 %v863, %v1016
        %v1072 = vmul.f32 %v864, %v1016
        %v1073 = vmul.f32 %v865, %v1026
        %v1074 = vmul.f32 %v866, %v1026
        %v1075 = vmul.f32 %v867, %v1036
        %v1076 = vmul.f32 %v868, %v1036
        %v1077 = vmul.f32 %v869, %v1046
        %v1078 = vmul.f32 %v870, %v1046
        %v1080 = vperm.slane %v322, 0
        %v1081 = vperm.slane %v322, 1
        %v1084 = vmul.f32 %v1047, %v1080
        %v1085 = vmul.f32 %v1048, %v1081
        %v1086 = vmul.f32 %v1049, %v1080
        %v1087 = vmul.f32 %v1050, %v1081
        %v1088 = vmul.f32 %v1051, %v1080
        %v1089 = vmul.f32 %v1052, %v1081
        %v1090 = vmul.f32 %v1053, %v1080
        %v1091 = vmul.f32 %v1054, %v1081
        %v1092 = vmul.f32 %v1055, %v1080
        %v1093 = vmul.f32 %v1056, %v1081
        %v1094 = vmul.f32 %v1057, %v1080
        %v1095 = vmul.f32 %v1058, %v1081
        %v1096 = vmul.f32 %v1059, %v1080
        %v1097 = vmul.f32 %v1060, %v1081
        %v1098 = vmul.f32 %v1061, %v1080
        %v1099 = vmul.f32 %v1062, %v1081
        %v1100 = vmul.f32 %v1063, %v1080
        %v1101 = vmul.f32 %v1064, %v1081
        %v1102 = vmul.f32 %v1065, %v1080
        %v1103 = vmul.f32 %v1066, %v1081
        %v1104 = vmul.f32 %v1067, %v1080
        %v1105 = vmul.f32 %v1068, %v1081
        %v1106 = vmul.f32 %v1069, %v1080
        %v1107 = vmul.f32 %v1070, %v1081
        %v1108 = vmul.f32 %v1071, %v1080
        %v1109 = vmul.f32 %v1072, %v1081
        %v1110 = vmul.f32 %v1073, %v1080
        %v1111 = vmul.f32 %v1074, %v1081
        %v1112 = vmul.f32 %v1075, %v1080
        %v1113 = vmul.f32 %v1076, %v1081
        %v1114 = vmul.f32 %v1077, %v1080
        %v1115 = vmul.f32 %v1078, %v1081
        %v1117 = vperm.slane %v323, 0
        %v1118 = vperm.slane %v323, 1
        %v1121 = vadd.f32 %v1084, %v1117
        %v1122 = vadd.f32 %v1085, %v1118
        %v1123 = vadd.f32 %v1086, %v1117
        %v1124 = vadd.f32 %v1087, %v1118
        %v1125 = vadd.f32 %v1088, %v1117
        %v1126 = vadd.f32 %v1089, %v1118
        %v1127 = vadd.f32 %v1090, %v1117
        %v1128 = vadd.f32 %v1091, %v1118
        %v1129 = vadd.f32 %v1092, %v1117
        %v1130 = vadd.f32 %v1093, %v1118
        %v1131 = vadd.f32 %v1094, %v1117
        %v1132 = vadd.f32 %v1095, %v1118
        %v1133 = vadd.f32 %v1096, %v1117
        %v1134 = vadd.f32 %v1097, %v1118
        %v1135 = vadd.f32 %v1098, %v1117
        %v1136 = vadd.f32 %v1099, %v1118
        %v1137 = vadd.f32 %v1100, %v1117
        %v1138 = vadd.f32 %v1101, %v1118
        %v1139 = vadd.f32 %v1102, %v1117
        %v1140 = vadd.f32 %v1103, %v1118
        %v1141 = vadd.f32 %v1104, %v1117
        %v1142 = vadd.f32 %v1105, %v1118
        %v1143 = vadd.f32 %v1106, %v1117
        %v1144 = vadd.f32 %v1107, %v1118
        %v1145 = vadd.f32 %v1108, %v1117
        %v1146 = vadd.f32 %v1109, %v1118
        %v1147 = vadd.f32 %v1110, %v1117
        %v1148 = vadd.f32 %v1111, %v1118
        %v1149 = vadd.f32 %v1112, %v1117
        %v1150 = vadd.f32 %v1113, %v1118
        %v1151 = vadd.f32 %v1114, %v1117
        %v1152 = vadd.f32 %v1115, %v1118
        %1153 = vst [vmem:[%s318] sm:$0xff] %v1121
        %1154 = vst [vmem:[%s318 + $0x8] sm:$0xff] %v1122
        %1155 = vst [vmem:[%s318 + $0x20] sm:$0xff] %v1123
        %1156 = vst [vmem:[%s318 + $0x28] sm:$0xff] %v1124
        %1157 = vst [vmem:[%s318 + $0x40] sm:$0xff] %v1125
        %1158 = vst [vmem:[%s318 + $0x48] sm:$0xff] %v1126
        %1159 = vst [vmem:[%s318 + $0x60] sm:$0xff] %v1127
        %1160 = vst [vmem:[%s318 + $0x68] sm:$0xff] %v1128
        %1161 = vst [vmem:[%s318 + $0x80] sm:$0xff] %v1129
        %1162 = vst [vmem:[%s318 + $0x88] sm:$0xff] %v1130
        %1163 = vst [vmem:[%s318 + $0xa0] sm:$0xff] %v1131
        %1164 = vst [vmem:[%s318 + $0xa8] sm:$0xff] %v1132
        %1165 = vst [vmem:[%s318 + $0xc0] sm:$0xff] %v1133
        %1166 = vst [vmem:[%s318 + $0xc8] sm:$0xff] %v1134
        %1167 = vst [vmem:[%s318 + $0xe0] sm:$0xff] %v1135
        %1168 = vst [vmem:[%s318 + $0xe8] sm:$0xff] %v1136
        %1169 = vst [vmem:[%s318 + $0x10] sm:$0xff] %v1137
        %1170 = vst [vmem:[%s318 + $0x18] sm:$0xff] %v1138
        %1171 = vst [vmem:[%s318 + $0x30] sm:$0xff] %v1139
        %1172 = vst [vmem:[%s318 + $0x38] sm:$0xff] %v1140
        %1173 = vst [vmem:[%s318 + $0x50] sm:$0xff] %v1141
        %1174 = vst [vmem:[%s318 + $0x58] sm:$0xff] %v1142
        %1175 = vst [vmem:[%s318 + $0x70] sm:$0xff] %v1143
        %1176 = vst [vmem:[%s318 + $0x78] sm:$0xff] %v1144
        %1177 = vst [vmem:[%s318 + $0x90] sm:$0xff] %v1145
        %1178 = vst [vmem:[%s318 + $0x98] sm:$0xff] %v1146
        %1179 = vst [vmem:[%s318 + $0xb0] sm:$0xff] %v1147
        %1180 = vst [vmem:[%s318 + $0xb8] sm:$0xff] %v1148
        %1181 = vst [vmem:[%s318 + $0xd0] sm:$0xff] %v1149
        %1182 = vst [vmem:[%s318 + $0xd8] sm:$0xff] %v1150
        %1183 = vst [vmem:[%s318 + $0xf0] sm:$0xff] %v1151
        %1184 = vst [vmem:[%s318 + $0xf8] sm:$0xff] %v1152
        %s1185 = sand.u32 %s137, 1
        %s1186 = scalar_lea.sflag [#allocation4], %s1185
        %s1187 = sand.u32 %s137, 1
        %s1188 = smul.addr %s1187, 256
        %s1189 = scalar_lea.vmem [#allocation3], %s1188
        // Predicated region
        $region79: #{tpu_custom_call.1} parent=73 // pred_check
          %p1190 = pneg %p147
        $region80: #{tpu_custom_call.1} parent=73 // pred_check_branch
          %1192 = sbr.rel (%p1190) target = $region82
        $region81: #{tpu_custom_call.1} parent=73 // pred_region
          %s1193 = smul.u32 8, %s19
          %1195 = vsyncadd %s1186, 0
          %s1196 = smul.addr %s1193, 4
          %s1197 = smul.addr %s1196, 8
          %s1198 = scalar_lea.hbm %s5, %s1197
          %s1199 = sshll.u32 %s1189, 4
          %s1200 = int_to_ptr.vmem [resolvable:$true] %s1199
          %s1201 = sshll.u32 %s1198, 4
          %s1202 = int_to_ptr.hbm [resolvable:$true] %s1201
          %1207 = dma.vmem_to_hbm [thread:$0]  %s1200, 4096, %s1202, %s1186, 512, 512, 32
        $region82: #{tpu_custom_call.1} parent=73 // pred_fallthru
          _
      $region74: #{tpu_custom_call.1} parent=5 // pred_fallthru
        _
      %p1208 = scmp.le.s32.totalorder 2, %s14
      // Predicated region
      $region83: #{tpu_custom_call.1} parent=5 // pred_check
        %p1209 = pneg %p1208
      $region84: #{tpu_custom_call.1} parent=5 // pred_check_branch
        %1211 = sbr.rel (%p1209) target = $region86
      $region85: #{tpu_custom_call.1} parent=5 // pred_region
        %s1212 = ssub.s32 %s14, 2
        // Predicated region
        $region87: #{tpu_custom_call.1} parent=85 // pred_check
          %p1213 = pneg %p153
        $region88: #{tpu_custom_call.1} parent=85 // pred_check_branch
          %1215 = sbr.rel (%p1213) target = $region90
        $region89: #{tpu_custom_call.1} parent=85 // pred_region
          %s1216 = sand.u32 %s138, 1
          %s1217 = scalar_lea.sflag [#allocation4], %s1216
          %s1218 = sand.u32 %s138, 1
          %s1219 = smul.addr %s1218, 256
          %s1220 = scalar_lea.vmem [#allocation3], %s1219
          %1222 = dma.done %s1217, 4096
        $region90: #{tpu_custom_call.1} parent=85 // pred_fallthru
          _
      $region86: #{tpu_custom_call.1} parent=5 // pred_fallthru
        _
    $region6: #{tpu_custom_call.1} parent=1 // loop_footer
      %s18 = sadd.s32 1, %s14
    $region7: #{tpu_custom_call.1} parent=1 // loop_footer_branch
      %13 = sbr.rel target = $region3
    $region8: #{tpu_custom_call.1} parent=1 // loop_exit
      _
    %1223 = vsyncpa [#allocation4], 1
    %s1224 = scalar_lea.sflag [#allocation4], 1
    %1225 = vsyncpa %s1224, 1

</llo_original>
